<compile_context>
chip_gen: v7x
topology: tpu7x:2x2x1
jax: 0.10.0
libtpu: 0.0.40
codegen_flags: <defaults>
</compile_context>

<pallas_src>
import functools

import jax
import jax.numpy as jnp
from jax.experimental import pallas as pl
from jax.experimental.pallas import tpu as pltpu

BN_EPS = 1e-5


def _round_up(x, m):
    return (x + m - 1) // m * m


def _bn_relu(x, gamma_row, beta_row):
    # BatchNorm1d (training-mode batch stats, biased variance) fused with ReLU.
    mean = jnp.mean(x, axis=0, keepdims=True)
    xc = x - mean                                    # reused for var + normalize
    var = jnp.mean(xc * xc, axis=0, keepdims=True)
    scale = gamma_row * jax.lax.rsqrt(var + BN_EPS)  # rsqrt -> EUP slot
    return jnp.maximum(xc * scale + beta_row, 0.0)


def _nmf_kernel(num_layers, nu_pad, ni_pad, *refs):
    """Ref layout (all inputs VMEM unless noted):
      refs[0:2]   user_idx (B,1) i32, item_idx (B,1) i32
      refs[2:5]   gmf_user (nu_pad,E), gmf_item (ni_pad,E),
                  mlp_block (nu_pad+ni_pad, 2E)   -- block-diag [mlp_user|0 ; 0|mlp_item]
      refs[5:5+3L]   per layer: W, gamma, beta    (linear biases dropped: cancel in BN)
      next 3      wh_gmf (1,E), wh_mlp (1,H_last), b_head SMEM (1,)
      last        out_ref (B, 1)
    """
    user_idx_ref, item_idx_ref = refs[0], refs[1]
    gmf_user_ref, gmf_item_ref, mlp_block_ref = refs[2], refs[3], refs[4]
    n_layer_refs = 3 * num_layers
    layer_refs = refs[5:5 + n_layer_refs]
    wh_gmf_ref, wh_mlp_ref, b_head_ref = refs[5 + n_layer_refs:8 + n_layer_refs]
    out_ref = refs[8 + n_layer_refs]

    f32 = jnp.float32
    B = out_ref.shape[0]
    n_cat = nu_pad + ni_pad

    u_idx = user_idx_ref[...]            # (B, 1) int32
    i_idx = item_idx_ref[...]            # (B, 1) int32

    # ---- One-hot gathers on the MXU (tables are VMEM-resident) ----
    iota_cat = jax.lax.broadcasted_iota(jnp.int32, (B, n_cat), 1)
    onehot_cat = (jnp.where(iota_cat == u_idx, 1.0, 0.0)
                  + jnp.where(iota_cat == i_idx + nu_pad, 1.0, 0.0))  # (B, n_cat)
    # Block-diag table => exact concat([u_mlp, i_mlp], axis=1) in one matmul.
    x = jnp.dot(onehot_cat, mlp_block_ref[...], preferred_element_type=f32)  # (B, 2E)

    # ---- MLP stack: Linear (bias cancels in BN) -> BN(batch stats) -> ReLU ----
    for l in range(num_layers):
        w_ref, g_ref, beta_ref = layer_refs[3 * l:3 * l + 3]
        x = jnp.dot(x, w_ref[...], preferred_element_type=f32)
        x = _bn_relu(x, g_ref[...], beta_ref[...])

    # ---- GMF branch (computed after the MLP stack) ----
    iota_u = jax.lax.broadcasted_iota(jnp.int32, (B, nu_pad), 1)
    iota_i = jax.lax.broadcasted_iota(jnp.int32, (B, ni_pad), 1)
    onehot_u = jnp.where(iota_u == u_idx, 1.0, 0.0)
    onehot_i = jnp.where(iota_i == i_idx, 1.0, 0.0)
    ugmf = jnp.dot(onehot_u, gmf_user_ref[...], preferred_element_type=f32)  # (B, E)
    igmf = jnp.dot(onehot_i, gmf_item_ref[...], preferred_element_type=f32)  # (B, E)
    x_gmf = ugmf * igmf

    # ---- NeuMF head: split VPU multiply + lane reduction (no concat, no MXU) ----
    # TODO(synk): Dropout(p=0.2) when dropout_flag=True is omitted (Identity path).
    g_part = jnp.sum(x_gmf * wh_gmf_ref[...], axis=-1, keepdims=True)   # (B, 1)
    m_part = jnp.sum(x * wh_mlp_ref[...], axis=-1, keepdims=True)       # (B, 1)
    logit = g_part + m_part + b_head_ref[0]                             # (B, 1)
    out_ref[...] = jax.nn.sigmoid(logit)


def init_params(config, key):
    emb_dim = config["emb_dim"]
    hidden_dims = config["hidden_dims"]
    n_users = config["user_cnts"]
    n_items = config["item_cnts"]

    keys = jax.random.split(key, 6 + 2 * len(hidden_dims))
    ki = iter(range(len(keys)))

    def nrm(shape, k, scale=0.1):
        return (scale * jax.random.normal(keys[k], shape)).astype(jnp.float32)

    params = {
        "gmf_user": nrm((n_users, emb_dim), next(ki)),
        "gmf_item": nrm((n_items, emb_dim), next(ki)),
        "mlp_user": nrm((n_users, emb_dim), next(ki)),
        "mlp_item": nrm((n_items, emb_dim), next(ki)),
    }
    layers = []
    in_dim = 2 * emb_dim
    for out_dim in hidden_dims:
        W = nrm((in_dim, out_dim), next(ki))      # stored as (in, out) == torch W.T
        b = nrm((out_dim,), next(ki), scale=0.01)
        gamma = jnp.ones((out_dim,), jnp.float32)
        beta = jnp.zeros((out_dim,), jnp.float32)
        layers.append((W, b, gamma, beta))
        in_dim = out_dim
    params["mlp_layers"] = layers
    params["head_W"] = nrm((emb_dim + hidden_dims[-1], 1), next(ki))
    params["head_b"] = nrm((1,), next(ki), scale=0.01)
    return params


def nmf_forward(params, user_idx, item_idx):
    B = user_idx.shape[0]
    E = params["gmf_user"].shape[1]
    n_users = params["gmf_user"].shape[0]
    n_items = params["gmf_item"].shape[0]
    num_layers = len(params["mlp_layers"])

    # Pad table row counts to multiples of 8 (sublane alignment); padded rows are
    # zero and can never be selected by a one-hot.
    nu_pad = _round_up(n_users, 8)
    ni_pad = _round_up(n_items, 8)

    def pad_rows(t, n_pad):
        return jnp.pad(t, ((0, n_pad - t.shape[0]), (0, 0)))

    gmf_user = pad_rows(params["gmf_user"], nu_pad)
    gmf_item = pad_rows(params["gmf_item"], ni_pad)
    mlp_user = pad_rows(params["mlp_user"], nu_pad)
    mlp_item = pad_rows(params["mlp_item"], ni_pad)

    # Block-diagonal MLP table: one one-hot matmul yields the exact
    # concat([u_mlp, i_mlp], axis=1) layer-0 input, with W0 kept unsplit.
    # (One-time packing; in production this would be precomputed.)
    mlp_block = jnp.concatenate(
        [jnp.concatenate([mlp_user, jnp.zeros((nu_pad, E), jnp.float32)], axis=1),
         jnp.concatenate([jnp.zeros((ni_pad, E), jnp.float32), mlp_item], axis=1)],
        axis=0)                                            # (nu_pad + ni_pad, 2E)

    vmem = pl.BlockSpec(memory_space=pltpu.MemorySpace.VMEM)
    smem = pl.BlockSpec(memory_space=pltpu.MemorySpace.SMEM)

    dense_args = [
        user_idx.astype(jnp.int32).reshape(B, 1),
        item_idx.astype(jnp.int32).reshape(B, 1),
        gmf_user, gmf_item, mlp_block,
    ]
    in_specs = [vmem] * 5

    for W, _b, g, beta in params["mlp_layers"]:
        # Linear bias dropped: train-mode BN subtracts the per-column batch mean,
        # so a per-column constant cancels exactly.
        dense_args += [W, g.reshape(1, -1), beta.reshape(1, -1)]
        in_specs += [vmem] * 3

    # Head weights pre-split + transposed to rows; bias as SMEM scalar.
    head_W = params["head_W"]                          # (E + H_last, 1)
    dense_args += [head_W[:E].T,                       # (1, E)
                   head_W[E:].T,                       # (1, H_last)
                   params["head_b"]]                   # (1,) -> SMEM
    in_specs += [vmem, vmem, smem]

    out = pl.pallas_call(
        functools.partial(_nmf_kernel, num_layers, nu_pad, ni_pad),
        out_shape=jax.ShapeDtypeStruct((B, 1), jnp.float32),
        in_specs=in_specs,
        out_specs=pl.BlockSpec(memory_space=pltpu.MemorySpace.VMEM),
    )(*dense_args)
    return out[:, 0]                                   # (B,) — matches x.squeeze()


def nmf_reference(params, user_idx, item_idx):
    """Pure-JAX reference for correctness checking (mirrors the PyTorch module)."""
    ugmf = params["gmf_user"][user_idx]
    igmf = params["gmf_item"][item_idx]
    x_gmf = ugmf * igmf
    x = jnp.concatenate(
        [params["mlp_user"][user_idx], params["mlp_item"][item_idx]], axis=1)
    for W, b, g, beta in params["mlp_layers"]:
        x = x @ W + b
        mean = jnp.mean(x, axis=0, keepdims=True)
        var = jnp.mean(jnp.square(x - mean), axis=0, keepdims=True)
        x = (x - mean) * jax.lax.rsqrt(var + BN_EPS) * g + beta
        x = jnp.maximum(x, 0.0)
    feat = jnp.concatenate([x_gmf, x], axis=1)
    logit = feat @ params["head_W"] + params["head_b"]
    return jax.nn.sigmoid(logit).squeeze()


if __name__ == "__main__":
    config = {
        "emb_dim": 32,
        "hidden_dims": [64, 32],
        "user_cnts": 100,
        "item_cnts": 200,
        "dropout_flag": False,
    }
    key = jax.random.PRNGKey(0)
    kp, ku, ki = jax.random.split(key, 3)

    params = init_params(config, kp)

    B = 8
    user_idx = jax.random.randint(ku, (B,), 0, config["user_cnts"], dtype=jnp.int32)
    item_idx = jax.random.randint(ki, (B,), 0, config["item_cnts"], dtype=jnp.int32)

    out = nmf_forward(params, user_idx, item_idx)
    out = jax.block_until_ready(out)

    ref = nmf_reference(params, user_idx, item_idx)
    assert out.shape == (B,), out.shape
    assert jnp.allclose(out, ref, atol=1e-4, rtol=1e-4), (out, ref)

    print("KERNEL_OK")
</pallas_src>

<mosaic_0001>
module attributes {stable_mosaic.version = 11 : i64} {
  func.func @_nmf_kernel(%arg0: memref<8x1xi32, #tpu.memory_space<vmem>>, %arg1: memref<8x1xi32, #tpu.memory_space<vmem>>, %arg2: memref<104x32xf32, #tpu.memory_space<vmem>>, %arg3: memref<200x32xf32, #tpu.memory_space<vmem>>, %arg4: memref<304x64xf32, #tpu.memory_space<vmem>>, %arg5: memref<64x64xf32, #tpu.memory_space<vmem>>, %arg6: memref<1x64xf32, #tpu.memory_space<vmem>>, %arg7: memref<1x64xf32, #tpu.memory_space<vmem>>, %arg8: memref<64x32xf32, #tpu.memory_space<vmem>>, %arg9: memref<1x32xf32, #tpu.memory_space<vmem>>, %arg10: memref<1x32xf32, #tpu.memory_space<vmem>>, %arg11: memref<1x32xf32, #tpu.memory_space<vmem>>, %arg12: memref<1x32xf32, #tpu.memory_space<vmem>>, %arg13: memref<1xf32, #tpu.memory_space<smem>>, %arg14: memref<8x1xf32, #tpu.memory_space<vmem>>) attributes {dimension_semantics = [], scalar_prefetch = 0 : i64, scratch_operands = 0 : i64, tpu.core_type = #tpu.core_type<tc>} {
    %c0 = arith.constant 0 : index
    %c0_0 = arith.constant 0 : index
    %0 = vector.load %arg0[%c0, %c0_0] : memref<8x1xi32, #tpu.memory_space<vmem>>, vector<8x1xi32>
    %c0_1 = arith.constant 0 : index
    %c0_2 = arith.constant 0 : index
    %1 = vector.load %arg1[%c0_1, %c0_2] : memref<8x1xi32, #tpu.memory_space<vmem>>, vector<8x1xi32>
    %2 = tpu.iota {dimensions = array<i32: 1>} : vector<8x304xi32>
    %3 = vector.broadcast %0 : vector<8x1xi32> to vector<8x304xi32>
    %4 = arith.cmpi eq, %2, %3 : vector<8x304xi32>
    %cst = arith.constant 1.000000e+00 : f32
    %cst_3 = arith.constant 0.000000e+00 : f32
    %5 = vector.broadcast %cst : f32 to vector<8x304xf32>
    %6 = vector.broadcast %cst_3 : f32 to vector<8x304xf32>
    %7 = arith.select %4, %5, %6 : vector<8x304xi1>, vector<8x304xf32>
    %c104_i32 = arith.constant 104 : i32
    %8 = vector.broadcast %c104_i32 : i32 to vector<8x1xi32>
    %9 = arith.addi %1, %8 : vector<8x1xi32>
    %10 = vector.broadcast %9 : vector<8x1xi32> to vector<8x304xi32>
    %11 = arith.cmpi eq, %2, %10 : vector<8x304xi32>
    %cst_4 = arith.constant 1.000000e+00 : f32
    %cst_5 = arith.constant 0.000000e+00 : f32
    %12 = vector.broadcast %cst_4 : f32 to vector<8x304xf32>
    %13 = vector.broadcast %cst_5 : f32 to vector<8x304xf32>
    %14 = arith.select %11, %12, %13 : vector<8x304xi1>, vector<8x304xf32>
    %15 = arith.addf %7, %14 : vector<8x304xf32>
    %c0_6 = arith.constant 0 : index
    %c0_7 = arith.constant 0 : index
    %16 = vector.load %arg4[%c0_6, %c0_7] : memref<304x64xf32, #tpu.memory_space<vmem>>, vector<304x64xf32>
    %cst_8 = arith.constant dense<0.000000e+00> : vector<8x64xf32>
    %17 = tpu.matmul %15, %16, %cst_8 {dimension_numbers = #tpu.dot_dimension_numbers<[1], [0], [0], [1], [0, 0, 1, 1], [], []>} : vector<8x304xf32>, vector<304x64xf32>, vector<8x64xf32> -> vector<8x64xf32>
    %c0_9 = arith.constant 0 : index
    %c0_10 = arith.constant 0 : index
    %18 = vector.load %arg5[%c0_9, %c0_10] : memref<64x64xf32, #tpu.memory_space<vmem>>, vector<64x64xf32>
    %cst_11 = arith.constant dense<0.000000e+00> : vector<8x64xf32>
    %19 = tpu.matmul %17, %18, %cst_11 {dimension_numbers = #tpu.dot_dimension_numbers<[1], [0], [0], [1], [0, 0, 1, 1], [], []>} : vector<8x64xf32>, vector<64x64xf32>, vector<8x64xf32> -> vector<8x64xf32>
    %c0_12 = arith.constant 0 : index
    %c0_13 = arith.constant 0 : index
    %20 = vector.load %arg6[%c0_12, %c0_13] : memref<1x64xf32, #tpu.memory_space<vmem>>, vector<1x64xf32>
    %c0_14 = arith.constant 0 : index
    %c0_15 = arith.constant 0 : index
    %21 = vector.load %arg7[%c0_14, %c0_15] : memref<1x64xf32, #tpu.memory_space<vmem>>, vector<1x64xf32>
    %cst_16 = arith.constant dense<0.000000e+00> : vector<64xf32>
    %22 = vector.multi_reduction <add>, %19, %cst_16 [0] : vector<8x64xf32> to vector<64xf32>
    %23 = vector.shape_cast %22 : vector<64xf32> to vector<1x64xf32>
    %cst_17 = arith.constant 8.000000e+00 : f32
    %24 = vector.broadcast %cst_17 : f32 to vector<1x64xf32>
    %25 = arith.divf %23, %24 : vector<1x64xf32>
    %26 = vector.broadcast %25 : vector<1x64xf32> to vector<8x64xf32>
    %27 = arith.subf %19, %26 : vector<8x64xf32>
    %28 = arith.mulf %27, %27 : vector<8x64xf32>
    %cst_18 = arith.constant dense<0.000000e+00> : vector<64xf32>
    %29 = vector.multi_reduction <add>, %28, %cst_18 [0] : vector<8x64xf32> to vector<64xf32>
    %30 = vector.shape_cast %29 : vector<64xf32> to vector<1x64xf32>
    %cst_19 = arith.constant 8.000000e+00 : f32
    %31 = vector.broadcast %cst_19 : f32 to vector<1x64xf32>
    %32 = arith.divf %30, %31 : vector<1x64xf32>
    %cst_20 = arith.constant 9.99999974E-6 : f32
    %33 = vector.broadcast %cst_20 : f32 to vector<1x64xf32>
    %34 = arith.addf %32, %33 : vector<1x64xf32>
    %35 = math.rsqrt %34 : vector<1x64xf32>
    %36 = arith.mulf %20, %35 : vector<1x64xf32>
    %37 = vector.broadcast %36 : vector<1x64xf32> to vector<8x64xf32>
    %38 = arith.mulf %27, %37 : vector<8x64xf32>
    %39 = vector.broadcast %21 : vector<1x64xf32> to vector<8x64xf32>
    %40 = arith.addf %38, %39 : vector<8x64xf32>
    %cst_21 = arith.constant 0.000000e+00 : f32
    %41 = vector.broadcast %cst_21 : f32 to vector<8x64xf32>
    %42 = arith.maximumf %40, %41 : vector<8x64xf32>
    %c0_22 = arith.constant 0 : index
    %c0_23 = arith.constant 0 : index
    %43 = vector.load %arg8[%c0_22, %c0_23] : memref<64x32xf32, #tpu.memory_space<vmem>>, vector<64x32xf32>
    %cst_24 = arith.constant dense<0.000000e+00> : vector<8x32xf32>
    %44 = tpu.matmul %42, %43, %cst_24 {dimension_numbers = #tpu.dot_dimension_numbers<[1], [0], [0], [1], [0, 0, 1, 1], [], []>} : vector<8x64xf32>, vector<64x32xf32>, vector<8x32xf32> -> vector<8x32xf32>
    %c0_25 = arith.constant 0 : index
    %c0_26 = arith.constant 0 : index
    %45 = vector.load %arg9[%c0_25, %c0_26] : memref<1x32xf32, #tpu.memory_space<vmem>>, vector<1x32xf32>
    %c0_27 = arith.constant 0 : index
    %c0_28 = arith.constant 0 : index
    %46 = vector.load %arg10[%c0_27, %c0_28] : memref<1x32xf32, #tpu.memory_space<vmem>>, vector<1x32xf32>
    %cst_29 = arith.constant dense<0.000000e+00> : vector<32xf32>
    %47 = vector.multi_reduction <add>, %44, %cst_29 [0] : vector<8x32xf32> to vector<32xf32>
    %48 = vector.shape_cast %47 : vector<32xf32> to vector<1x32xf32>
    %cst_30 = arith.constant 8.000000e+00 : f32
    %49 = vector.broadcast %cst_30 : f32 to vector<1x32xf32>
    %50 = arith.divf %48, %49 : vector<1x32xf32>
    %51 = vector.broadcast %50 : vector<1x32xf32> to vector<8x32xf32>
    %52 = arith.subf %44, %51 : vector<8x32xf32>
    %53 = arith.mulf %52, %52 : vector<8x32xf32>
    %cst_31 = arith.constant dense<0.000000e+00> : vector<32xf32>
    %54 = vector.multi_reduction <add>, %53, %cst_31 [0] : vector<8x32xf32> to vector<32xf32>
    %55 = vector.shape_cast %54 : vector<32xf32> to vector<1x32xf32>
    %cst_32 = arith.constant 8.000000e+00 : f32
    %56 = vector.broadcast %cst_32 : f32 to vector<1x32xf32>
    %57 = arith.divf %55, %56 : vector<1x32xf32>
    %cst_33 = arith.constant 9.99999974E-6 : f32
    %58 = vector.broadcast %cst_33 : f32 to vector<1x32xf32>
    %59 = arith.addf %57, %58 : vector<1x32xf32>
    %60 = math.rsqrt %59 : vector<1x32xf32>
    %61 = arith.mulf %45, %60 : vector<1x32xf32>
    %62 = vector.broadcast %61 : vector<1x32xf32> to vector<8x32xf32>
    %63 = arith.mulf %52, %62 : vector<8x32xf32>
    %64 = vector.broadcast %46 : vector<1x32xf32> to vector<8x32xf32>
    %65 = arith.addf %63, %64 : vector<8x32xf32>
    %cst_34 = arith.constant 0.000000e+00 : f32
    %66 = vector.broadcast %cst_34 : f32 to vector<8x32xf32>
    %67 = arith.maximumf %65, %66 : vector<8x32xf32>
    %68 = tpu.iota {dimensions = array<i32: 1>} : vector<8x104xi32>
    %69 = tpu.iota {dimensions = array<i32: 1>} : vector<8x200xi32>
    %70 = vector.broadcast %0 : vector<8x1xi32> to vector<8x104xi32>
    %71 = arith.cmpi eq, %68, %70 : vector<8x104xi32>
    %cst_35 = arith.constant 1.000000e+00 : f32
    %cst_36 = arith.constant 0.000000e+00 : f32
    %72 = vector.broadcast %cst_35 : f32 to vector<8x104xf32>
    %73 = vector.broadcast %cst_36 : f32 to vector<8x104xf32>
    %74 = arith.select %71, %72, %73 : vector<8x104xi1>, vector<8x104xf32>
    %75 = vector.broadcast %1 : vector<8x1xi32> to vector<8x200xi32>
    %76 = arith.cmpi eq, %69, %75 : vector<8x200xi32>
    %cst_37 = arith.constant 1.000000e+00 : f32
    %cst_38 = arith.constant 0.000000e+00 : f32
    %77 = vector.broadcast %cst_37 : f32 to vector<8x200xf32>
    %78 = vector.broadcast %cst_38 : f32 to vector<8x200xf32>
    %79 = arith.select %76, %77, %78 : vector<8x200xi1>, vector<8x200xf32>
    %c0_39 = arith.constant 0 : index
    %c0_40 = arith.constant 0 : index
    %80 = vector.load %arg2[%c0_39, %c0_40] : memref<104x32xf32, #tpu.memory_space<vmem>>, vector<104x32xf32>
    %cst_41 = arith.constant dense<0.000000e+00> : vector<8x32xf32>
    %81 = tpu.matmul %74, %80, %cst_41 {dimension_numbers = #tpu.dot_dimension_numbers<[1], [0], [0], [1], [0, 0, 1, 1], [], []>} : vector<8x104xf32>, vector<104x32xf32>, vector<8x32xf32> -> vector<8x32xf32>
    %c0_42 = arith.constant 0 : index
    %c0_43 = arith.constant 0 : index
    %82 = vector.load %arg3[%c0_42, %c0_43] : memref<200x32xf32, #tpu.memory_space<vmem>>, vector<200x32xf32>
    %cst_44 = arith.constant dense<0.000000e+00> : vector<8x32xf32>
    %83 = tpu.matmul %79, %82, %cst_44 {dimension_numbers = #tpu.dot_dimension_numbers<[1], [0], [0], [1], [0, 0, 1, 1], [], []>} : vector<8x200xf32>, vector<200x32xf32>, vector<8x32xf32> -> vector<8x32xf32>
    %84 = arith.mulf %81, %83 : vector<8x32xf32>
    %c0_45 = arith.constant 0 : index
    %c0_46 = arith.constant 0 : index
    %85 = vector.load %arg11[%c0_45, %c0_46] : memref<1x32xf32, #tpu.memory_space<vmem>>, vector<1x32xf32>
    %86 = vector.broadcast %85 : vector<1x32xf32> to vector<8x32xf32>
    %87 = arith.mulf %84, %86 : vector<8x32xf32>
    %cst_47 = arith.constant dense<0.000000e+00> : vector<8xf32>
    %88 = vector.multi_reduction <add>, %87, %cst_47 [1] : vector<8x32xf32> to vector<8xf32>
    %89 = vector.shape_cast %88 : vector<8xf32> to vector<8x1xf32>
    %c0_48 = arith.constant 0 : index
    %c0_49 = arith.constant 0 : index
    %90 = vector.load %arg12[%c0_48, %c0_49] : memref<1x32xf32, #tpu.memory_space<vmem>>, vector<1x32xf32>
    %91 = vector.broadcast %90 : vector<1x32xf32> to vector<8x32xf32>
    %92 = arith.mulf %67, %91 : vector<8x32xf32>
    %cst_50 = arith.constant dense<0.000000e+00> : vector<8xf32>
    %93 = vector.multi_reduction <add>, %92, %cst_50 [1] : vector<8x32xf32> to vector<8xf32>
    %94 = vector.shape_cast %93 : vector<8xf32> to vector<8x1xf32>
    %95 = arith.addf %89, %94 : vector<8x1xf32>
    %c0_51 = arith.constant 0 : index
    %96 = memref.load %arg13[%c0_51] : memref<1xf32, #tpu.memory_space<smem>>
    %97 = vector.broadcast %96 : f32 to vector<8x1xf32>
    %98 = arith.addf %95, %97 : vector<8x1xf32>
    %99 = arith.negf %98 : vector<8x1xf32>
    %100 = math.exp %99 : vector<8x1xf32>
    %cst_52 = arith.constant 1.000000e+00 : f32
    %101 = vector.broadcast %cst_52 : f32 to vector<8x1xf32>
    %102 = arith.addf %101, %100 : vector<8x1xf32>
    %103 = arith.divf %101, %102 : vector<8x1xf32>
    %c0_53 = arith.constant 0 : index
    %c0_54 = arith.constant 0 : index
    %104 = vector.load %arg14[%c0_53, %c0_54] : memref<8x1xf32, #tpu.memory_space<vmem>>, vector<8x1xf32>
    tpu.vector_store %arg14[%c0_53, %c0_54], %103 {strides = array<i32>} : memref<8x1xf32, #tpu.memory_space<vmem>>, vector<8x1xf32>,
    return
  }
}

</mosaic_0001>

<llo_original>
// kernel: tpu_custom_call.1
$region0: #{tpu_custom_call.1}
  #allocation0 [shape = 'u32[]', space=smem, size = 0x4, offset = 0x4, fixed_abs, tag = 'smem constant byte address 0x4 - core index']
  #allocation1 [shape = 'u32[144,128]{1,0:T(1,128)}', space=vmem, size = 0x12000, scoped, tag = 'internal scratch']
  #allocation2 [shape = 'f32[1]{0:T(128)S(6)}', space=smem, size = 0x200, scoped, tag = 'scoped memory for tpu_custom_call.1']
  %s0 = inlined_call_operand.vmem [shape: s32[8,1], index: 0, kind: input, shape index: {}]
  %s1 = inlined_call_operand.vmem [shape: s32[8,1], index: 1, kind: input, shape index: {}]
  %s2 = inlined_call_operand.vmem [shape: f32[104,32], index: 2, kind: input, shape index: {}]
  %s3 = inlined_call_operand.vmem [shape: f32[200,32], index: 3, kind: input, shape index: {}]
  %s4 = inlined_call_operand.vmem [shape: f32[304,64], index: 4, kind: input, shape index: {}]
  %s5 = inlined_call_operand.vmem [shape: f32[64,64], index: 5, kind: input, shape index: {}]
  %s6 = inlined_call_operand.vmem [shape: f32[1,64], index: 6, kind: input, shape index: {}]
  %s7 = inlined_call_operand.vmem [shape: f32[1,64], index: 7, kind: input, shape index: {}]
  %s8 = inlined_call_operand.vmem [shape: f32[64,32], index: 8, kind: input, shape index: {}]
  %s9 = inlined_call_operand.vmem [shape: f32[1,32], index: 9, kind: input, shape index: {}]
  %s10 = inlined_call_operand.vmem [shape: f32[1,32], index: 10, kind: input, shape index: {}]
  %s11 = inlined_call_operand.vmem [shape: f32[1,32], index: 11, kind: input, shape index: {}]
  %s12 = inlined_call_operand.vmem [shape: f32[1,32], index: 12, kind: input, shape index: {}]
  %s13 = inlined_call_operand.<no memory space> [shape: f32[1], index: 13, kind: input, shape index: {}]
  %s14 = inlined_call_operand.vmem [shape: f32[8,1], index: 14, kind: output, shape index: {}]
  %s15 = sld [smem:[#allocation0]]
  $region66: #{tpu_custom_call.1} parent=0
    _
  %s17 = ssub.s32 1, %s15
  %s18 = scalar_select 0, %s17, %s15
  %19 = sst [smem:[#allocation2]] %s13
  // Predicated region
  $region2: #{tpu_custom_call.1} parent=0 // pred_check
    _
  $region3: #{tpu_custom_call.1} parent=0 // pred_check_branch
    %21 = sbr.rel (0) target = $region5
  $region4: #{tpu_custom_call.1} parent=0 // pred_region
    _
  $region5: #{tpu_custom_call.1} parent=0 // pred_fallthru
    _
  // Predicated region
  $region6: #{tpu_custom_call.1} parent=0 // pred_check
    _
  $region7: #{tpu_custom_call.1} parent=0 // pred_check_branch
    %23 = sbr.rel (0) target = $region9
  $region8: #{tpu_custom_call.1} parent=0 // pred_region
    _
  $region9: #{tpu_custom_call.1} parent=0 // pred_fallthru
    _
  // Predicated region
  $region10: #{tpu_custom_call.1} parent=0 // pred_check
    _
  $region11: #{tpu_custom_call.1} parent=0 // pred_check_branch
    %25 = sbr.rel (0) target = $region13
  $region12: #{tpu_custom_call.1} parent=0 // pred_region
    _
  $region13: #{tpu_custom_call.1} parent=0 // pred_fallthru
    _
  // Predicated region
  $region14: #{tpu_custom_call.1} parent=0 // pred_check
    _
  $region15: #{tpu_custom_call.1} parent=0 // pred_check_branch
    %27 = sbr.rel (0) target = $region17
  $region16: #{tpu_custom_call.1} parent=0 // pred_region
    _
  $region17: #{tpu_custom_call.1} parent=0 // pred_fallthru
    _
  // Predicated region
  $region18: #{tpu_custom_call.1} parent=0 // pred_check
    _
  $region19: #{tpu_custom_call.1} parent=0 // pred_check_branch
    %29 = sbr.rel (0) target = $region21
  $region20: #{tpu_custom_call.1} parent=0 // pred_region
    _
  $region21: #{tpu_custom_call.1} parent=0 // pred_fallthru
    _
  // Predicated region
  $region22: #{tpu_custom_call.1} parent=0 // pred_check
    _
  $region23: #{tpu_custom_call.1} parent=0 // pred_check_branch
    %31 = sbr.rel (0) target = $region25
  $region24: #{tpu_custom_call.1} parent=0 // pred_region
    _
  $region25: #{tpu_custom_call.1} parent=0 // pred_fallthru
    _
  // Predicated region
  $region26: #{tpu_custom_call.1} parent=0 // pred_check
    _
  $region27: #{tpu_custom_call.1} parent=0 // pred_check_branch
    %33 = sbr.rel (0) target = $region29
  $region28: #{tpu_custom_call.1} parent=0 // pred_region
    _
  $region29: #{tpu_custom_call.1} parent=0 // pred_fallthru
    _
  // Predicated region
  $region30: #{tpu_custom_call.1} parent=0 // pred_check
    _
  $region31: #{tpu_custom_call.1} parent=0 // pred_check_branch
    %35 = sbr.rel (0) target = $region33
  $region32: #{tpu_custom_call.1} parent=0 // pred_region
    _
  $region33: #{tpu_custom_call.1} parent=0 // pred_fallthru
    _
  // Predicated region
  $region34: #{tpu_custom_call.1} parent=0 // pred_check
    _
  $region35: #{tpu_custom_call.1} parent=0 // pred_check_branch
    %37 = sbr.rel (0) target = $region37
  $region36: #{tpu_custom_call.1} parent=0 // pred_region
    _
  $region37: #{tpu_custom_call.1} parent=0 // pred_fallthru
    _
  // Predicated region
  $region38: #{tpu_custom_call.1} parent=0 // pred_check
    _
  $region39: #{tpu_custom_call.1} parent=0 // pred_check_branch
    %39 = sbr.rel (0) target = $region41
  $region40: #{tpu_custom_call.1} parent=0 // pred_region
    _
  $region41: #{tpu_custom_call.1} parent=0 // pred_fallthru
    _
  // Predicated region
  $region42: #{tpu_custom_call.1} parent=0 // pred_check
    _
  $region43: #{tpu_custom_call.1} parent=0 // pred_check_branch
    %41 = sbr.rel (0) target = $region45
  $region44: #{tpu_custom_call.1} parent=0 // pred_region
    _
  $region45: #{tpu_custom_call.1} parent=0 // pred_fallthru
    _
  // Predicated region
  $region46: #{tpu_custom_call.1} parent=0 // pred_check
    _
  $region47: #{tpu_custom_call.1} parent=0 // pred_check_branch
    %43 = sbr.rel (0) target = $region49
  $region48: #{tpu_custom_call.1} parent=0 // pred_region
    _
  $region49: #{tpu_custom_call.1} parent=0 // pred_fallthru
    _
  // Predicated region
  $region50: #{tpu_custom_call.1} parent=0 // pred_check
    _
  $region51: #{tpu_custom_call.1} parent=0 // pred_check_branch
    %45 = sbr.rel (0) target = $region53
  $region52: #{tpu_custom_call.1} parent=0 // pred_region
    _
  $region53: #{tpu_custom_call.1} parent=0 // pred_fallthru
    _
  // Predicated region
  $region54: #{tpu_custom_call.1} parent=0 // pred_check
    _
  $region55: #{tpu_custom_call.1} parent=0 // pred_check_branch
    %47 = sbr.rel (0) target = $region57
  $region56: #{tpu_custom_call.1} parent=0 // pred_region
    _
  $region57: #{tpu_custom_call.1} parent=0 // pred_fallthru
    _
  %v48 = vld [vmem:[%s0] sm:$0xff]
  %v49 = vld [vmem:[%s1] sm:$0xff]
  %v50 = vlaneseq
  %v51 = vand.u32 %v50, 127
  %v52 = vadd.s32 %v51, 128
  %v53 = vadd.s32 %v51, 256
  %54 = vset.pattern.permute.xlu0 0
  %55 = vperm.xlu0 %54, %v48
  %v56 = vpop.permute.xlu0 %55
  %vm57 = vcmp.eq.s32.totalorder %v51, %v56
  %vm58 = vcmp.eq.s32.totalorder %v52, %v56
  %vm59 = vcmp.eq.s32.totalorder %v53, %v56
  %v60 = vsel %vm57, 1.0, 0.0
  %v61 = vsel %vm58, 1.0, 0.0
  %v62 = vsel %vm59, 1.0, 0.0
  %v63 = vadd.s32 %v49, 104
  %64 = vset.pattern.permute.xlu0 0
  %65 = vperm.xlu0 %64, %v63
  %v66 = vpop.permute.xlu0 %65
  %vm67 = vcmp.eq.s32.totalorder %v51, %v66
  %vm68 = vcmp.eq.s32.totalorder %v52, %v66
  %vm69 = vcmp.eq.s32.totalorder %v53, %v66
  %v70 = vsel %vm67, 1.0, 0.0
  %v71 = vsel %vm68, 1.0, 0.0
  %v72 = vsel %vm69, 1.0, 0.0
  %v73 = vadd.f32 %v60, %v70
  %v74 = vadd.f32 %v61, %v71
  %v75 = vadd.f32 %v62, %v72
  %v76 = vld [vmem:[%s4] sm:$0xff]
  %v77 = vld [vmem:[%s4 + $0x8] sm:$0xff]
  %v78 = vld [vmem:[%s4 + $0x10] sm:$0xff]
  %v79 = vld [vmem:[%s4 + $0x18] sm:$0xff]
  %v80 = vld [vmem:[%s4 + $0x20] sm:$0xff]
  %v81 = vld [vmem:[%s4 + $0x28] sm:$0xff]
  %v82 = vld [vmem:[%s4 + $0x30] sm:$0xff]
  %v83 = vld [vmem:[%s4 + $0x38] sm:$0xff]
  %v84 = vld [vmem:[%s4 + $0x40] sm:$0xff]
  %v85 = vld [vmem:[%s4 + $0x48] sm:$0xff]
  %v86 = vld [vmem:[%s4 + $0x50] sm:$0xff]
  %v87 = vld [vmem:[%s4 + $0x58] sm:$0xff]
  %v88 = vld [vmem:[%s4 + $0x60] sm:$0xff]
  %v89 = vld [vmem:[%s4 + $0x68] sm:$0xff]
  %v90 = vld [vmem:[%s4 + $0x70] sm:$0xff]
  %v91 = vld [vmem:[%s4 + $0x78] sm:$0xff]
  %v92 = vld [vmem:[%s4 + $0x80] sm:$0xff]
  %v93 = vld [vmem:[%s4 + $0x88] sm:$0xff]
  %v94 = vld [vmem:[%s4 + $0x90] sm:$0xff]
  %v95 = vld [vmem:[%s4 + $0x98] sm:$0xff]
  %v96 = vld [vmem:[%s4 + $0xa0] sm:$0xff]
  %v97 = vld [vmem:[%s4 + $0xa8] sm:$0xff]
  %v98 = vld [vmem:[%s4 + $0xb0] sm:$0xff]
  %v99 = vld [vmem:[%s4 + $0xb8] sm:$0xff]
  %v100 = vld [vmem:[%s4 + $0xc0] sm:$0xff]
  %v101 = vld [vmem:[%s4 + $0xc8] sm:$0xff]
  %v102 = vld [vmem:[%s4 + $0xd0] sm:$0xff]
  %v103 = vld [vmem:[%s4 + $0xd8] sm:$0xff]
  %v104 = vld [vmem:[%s4 + $0xe0] sm:$0xff]
  %v105 = vld [vmem:[%s4 + $0xe8] sm:$0xff]
  %v106 = vld [vmem:[%s4 + $0xf0] sm:$0xff]
  %v107 = vld [vmem:[%s4 + $0xf8] sm:$0xff]
  %v108 = vld [vmem:[%s4 + $0x100] sm:$0xff]
  %v109 = vld [vmem:[%s4 + $0x108] sm:$0xff]
  %v110 = vld [vmem:[%s4 + $0x110] sm:$0xff]
  %v111 = vld [vmem:[%s4 + $0x118] sm:$0xff]
  %v112 = vld [vmem:[%s4 + $0x120] sm:$0xff]
  %v113 = vld [vmem:[%s4 + $0x128] sm:$0xff]
  %vm114 = vcmask 392192
  %v116 = vsel %vm114, %v75, 0
  %118 = vmatprep.subr.mxu0 0.0
  %119 = vmatpush1.msra.mxu0 %v76
  %120 = vmatprep.subr.mxu0 0.0
  %121 = vmatpush1.msra.mxu0 %v77
  %122 = vmatprep.subr.mxu0 0.0
  %123 = vmatpush1.msra.mxu0 %v78
  %124 = vmatprep.subr.mxu0 0.0
  %125 = vmatpush1.msra.mxu0 %v79
  %126 = vmatprep.subr.mxu0 0.0
  %127 = vmatpush1.msra.mxu0 %v80
  %128 = vmatprep.subr.mxu0 0.0
  %129 = vmatpush1.msra.mxu0 %v81
  %130 = vmatprep.subr.mxu0 0.0
  %131 = vmatpush1.msra.mxu0 %v82
  %132 = vmatprep.subr.mxu0 0.0
  %133 = vmatpush1.msra.mxu0 %v83
  %134 = vmatprep.subr.mxu0 0.0
  %135 = vmatpush1.msra.mxu0 %v84
  %136 = vmatprep.subr.mxu0 0.0
  %137 = vmatpush1.msra.mxu0 %v85
  %138 = vmatprep.subr.mxu0 0.0
  %139 = vmatpush1.msra.mxu0 %v86
  %140 = vmatprep.subr.mxu0 0.0
  %141 = vmatpush1.msra.mxu0 %v87
  %142 = vmatprep.subr.mxu0 0.0
  %143 = vmatpush1.msra.mxu0 %v88
  %144 = vmatprep.subr.mxu0 0.0
  %145 = vmatpush1.msra.mxu0 %v89
  %146 = vmatprep.subr.mxu0 0.0
  %147 = vmatpush1.msra.mxu0 %v90
  %148 = vmatprep.subr.mxu0 0.0
  %149 = vmatpush1.msra.mxu0 %v91
  %150 = vmatprep.subr.mxu0 0.0
  %151 = vmatpush1.msra.mxu0 %v92
  %152 = vmatprep.subr.mxu0 0.0
  %153 = vmatpush1.msra.mxu0 %v93
  %154 = vmatprep.subr.mxu0 0.0
  %155 = vmatpush1.msra.mxu0 %v94
  %156 = vmatprep.subr.mxu0 0.0
  %157 = vmatpush1.msra.mxu0 %v95
  %158 = vmatprep.subr.mxu0 0.0
  %159 = vmatpush1.msra.mxu0 %v96
  %160 = vmatprep.subr.mxu0 0.0
  %161 = vmatpush1.msra.mxu0 %v97
  %162 = vmatprep.subr.mxu0 0.0
  %163 = vmatpush1.msra.mxu0 %v98
  %164 = vmatprep.subr.mxu0 0.0
  %165 = vmatpush1.msra.mxu0 %v99
  %166 = vmatprep.subr.mxu0 0.0
  %167 = vmatpush1.msra.mxu0 %v100
  %168 = vmatprep.subr.mxu0 0.0
  %169 = vmatpush1.msra.mxu0 %v101
  %170 = vmatprep.subr.mxu0 0.0
  %171 = vmatpush1.msra.mxu0 %v102
  %172 = vmatprep.subr.mxu0 0.0
  %173 = vmatpush1.msra.mxu0 %v103
  %174 = vmatprep.subr.mxu0 0.0
  %175 = vmatpush1.msra.mxu0 %v104
  %176 = vmatprep.subr.mxu0 0.0
  %177 = vmatpush1.msra.mxu0 %v105
  %178 = vmatprep.subr.mxu0 0.0
  %179 = vmatpush1.msra.mxu0 %v106
  %180 = vmatprep.subr.mxu0 0.0
  %181 = vmatpush1.msra.mxu0 %v107
  %182 = vmatprep.mubr.f32.mxu0 %v74
  %183 = vmatmul.mubr.f32.gmra.mrb[0].mxu0 %v73
  %v184 = vpop.f32.mrb[0].mxu0
  %v185 = vadd.f32 0.0, %v184
  %v186 = vpop.f32.mrb[0].mxu0
  %187 = vdwg.mxu0
  %188 = vmatprep.subr.mxu0 0.0
  %189 = vmatpush1.msra.mxu0 %v108
  %190 = vmatprep.subr.mxu0 0.0
  %191 = vmatpush1.msra.mxu0 %v109
  %192 = vmatprep.subr.mxu0 0.0
  %193 = vmatpush1.msra.mxu0 %v110
  %194 = vmatprep.subr.mxu0 0.0
  %195 = vmatpush1.msra.mxu0 %v111
  %196 = vmatprep.subr.mxu0 0.0
  %197 = vmatpush1.msra.mxu0 %v112
  %198 = vmatprep.subr.mxu0 0.0
  %199 = vmatpush1.msra.mxu0 %v113
  %200 = vmatprep.subr.mxu0 0.0
  %201 = vmatpush1.msra.mxu0 0.0
  %202 = vmatprep.subr.mxu0 0.0
  %203 = vmatpush1.msra.mxu0 0.0
  %204 = vmatprep.subr.mxu0 0.0
  %205 = vmatpush1.msra.mxu0 0.0
  %206 = vmatprep.subr.mxu0 0.0
  %207 = vmatpush1.msra.mxu0 0.0
  %208 = vmatprep.subr.mxu0 0.0
  %209 = vmatpush1.msra.mxu0 0.0
  %210 = vmatprep.subr.mxu0 0.0
  %211 = vmatpush1.msra.mxu0 0.0
  %212 = vmatprep.subr.mxu0 0.0
  %213 = vmatpush1.msra.mxu0 0.0
  %214 = vmatprep.subr.mxu0 0.0
  %215 = vmatpush1.msra.mxu0 0.0
  %216 = vmatprep.subr.mxu0 0.0
  %217 = vmatpush1.msra.mxu0 0.0
  %218 = vmatprep.subr.mxu0 0.0
  %219 = vmatpush1.msra.mxu0 0.0
  %220 = vmatprep.subr.mxu0 0.0
  %221 = vmatpush1.msra.mxu0 0.0
  %222 = vmatprep.subr.mxu0 0.0
  %223 = vmatpush1.msra.mxu0 0.0
  %224 = vmatprep.subr.mxu0 0.0
  %225 = vmatpush1.msra.mxu0 0.0
  %226 = vmatprep.subr.mxu0 0.0
  %227 = vmatpush1.msra.mxu0 0.0
  %228 = vmatprep.subr.mxu0 0.0
  %229 = vmatpush1.msra.mxu0 0.0
  %230 = vmatprep.subr.mxu0 0.0
  %231 = vmatpush1.msra.mxu0 0.0
  %232 = vmatprep.subr.mxu0 0.0
  %233 = vmatpush1.msra.mxu0 0.0
  %234 = vmatprep.subr.mxu0 0.0
  %235 = vmatpush1.msra.mxu0 0.0
  %236 = vmatprep.subr.mxu0 0.0
  %237 = vmatpush1.msra.mxu0 0.0
  %238 = vmatprep.subr.mxu0 0.0
  %239 = vmatpush1.msra.mxu0 0.0
  %240 = vmatprep.subr.mxu0 0.0
  %241 = vmatpush1.msra.mxu0 0.0
  %242 = vmatprep.subr.mxu0 0.0
  %243 = vmatpush1.msra.mxu0 0.0
  %244 = vmatprep.subr.mxu0 0.0
  %245 = vmatpush1.msra.mxu0 0.0
  %246 = vmatprep.subr.mxu0 0.0
  %247 = vmatpush1.msra.mxu0 0.0
  %248 = vmatprep.subr.mxu0 0.0
  %249 = vmatpush1.msra.mxu0 0.0
  %250 = vmatprep.subr.mxu0 0.0
  %251 = vmatpush1.msra.mxu0 0.0
  %252 = vmatprep.mubr.f32.mxu0 0.0
  %253 = vmatmul.mubr.f32.gmra.mrb[0].mxu0 %v116
  %v254 = vpop.f32.mrb[0].mxu0
  %v255 = vadd.f32 %v185, %v254
  %v256 = vpop.f32.mrb[0].mxu0
  %257 = vdwg.mxu0
  %v258 = vld [vmem:[%s5] sm:$0xff]
  %v259 = vld [vmem:[%s5 + $0x8] sm:$0xff]
  %v260 = vld [vmem:[%s5 + $0x10] sm:$0xff]
  %v261 = vld [vmem:[%s5 + $0x18] sm:$0xff]
  %v262 = vld [vmem:[%s5 + $0x20] sm:$0xff]
  %v263 = vld [vmem:[%s5 + $0x28] sm:$0xff]
  %v264 = vld [vmem:[%s5 + $0x30] sm:$0xff]
  %v265 = vld [vmem:[%s5 + $0x38] sm:$0xff]
  %vm266 = vcmask 523264
  %v268 = vsel %vm266, %v255, 0
  %270 = vmatprep.subr.mxu0 0.0
  %271 = vmatpush1.msra.mxu0 %v258
  %272 = vmatprep.subr.mxu0 0.0
  %273 = vmatpush1.msra.mxu0 %v259
  %274 = vmatprep.subr.mxu0 0.0
  %275 = vmatpush1.msra.mxu0 %v260
  %276 = vmatprep.subr.mxu0 0.0
  %277 = vmatpush1.msra.mxu0 %v261
  %278 = vmatprep.subr.mxu0 0.0
  %279 = vmatpush1.msra.mxu0 %v262
  %280 = vmatprep.subr.mxu0 0.0
  %281 = vmatpush1.msra.mxu0 %v263
  %282 = vmatprep.subr.mxu0 0.0
  %283 = vmatpush1.msra.mxu0 %v264
  %284 = vmatprep.subr.mxu0 0.0
  %285 = vmatpush1.msra.mxu0 %v265
  %286 = vmatprep.subr.mxu0 0.0
  %287 = vmatpush1.msra.mxu0 0.0
  %288 = vmatprep.subr.mxu0 0.0
  %289 = vmatpush1.msra.mxu0 0.0
  %290 = vmatprep.subr.mxu0 0.0
  %291 = vmatpush1.msra.mxu0 0.0
  %292 = vmatprep.subr.mxu0 0.0
  %293 = vmatpush1.msra.mxu0 0.0
  %294 = vmatprep.subr.mxu0 0.0
  %295 = vmatpush1.msra.mxu0 0.0
  %296 = vmatprep.subr.mxu0 0.0
  %297 = vmatpush1.msra.mxu0 0.0
  %298 = vmatprep.subr.mxu0 0.0
  %299 = vmatpush1.msra.mxu0 0.0
  %300 = vmatprep.subr.mxu0 0.0
  %301 = vmatpush1.msra.mxu0 0.0
  %302 = vmatprep.subr.mxu0 0.0
  %303 = vmatpush1.msra.mxu0 0.0
  %304 = vmatprep.subr.mxu0 0.0
  %305 = vmatpush1.msra.mxu0 0.0
  %306 = vmatprep.subr.mxu0 0.0
  %307 = vmatpush1.msra.mxu0 0.0
  %308 = vmatprep.subr.mxu0 0.0
  %309 = vmatpush1.msra.mxu0 0.0
  %310 = vmatprep.subr.mxu0 0.0
  %311 = vmatpush1.msra.mxu0 0.0
  %312 = vmatprep.subr.mxu0 0.0
  %313 = vmatpush1.msra.mxu0 0.0
  %314 = vmatprep.subr.mxu0 0.0
  %315 = vmatpush1.msra.mxu0 0.0
  %316 = vmatprep.subr.mxu0 0.0
  %317 = vmatpush1.msra.mxu0 0.0
  %318 = vmatprep.subr.mxu0 0.0
  %319 = vmatpush1.msra.mxu0 0.0
  %320 = vmatprep.subr.mxu0 0.0
  %321 = vmatpush1.msra.mxu0 0.0
  %322 = vmatprep.subr.mxu0 0.0
  %323 = vmatpush1.msra.mxu0 0.0
  %324 = vmatprep.subr.mxu0 0.0
  %325 = vmatpush1.msra.mxu0 0.0
  %326 = vmatprep.subr.mxu0 0.0
  %327 = vmatpush1.msra.mxu0 0.0
  %328 = vmatprep.subr.mxu0 0.0
  %329 = vmatpush1.msra.mxu0 0.0
  %330 = vmatprep.subr.mxu0 0.0
  %331 = vmatpush1.msra.mxu0 0.0
  %332 = vmatprep.subr.mxu0 0.0
  %333 = vmatpush1.msra.mxu0 0.0
  %334 = vmatprep.mubr.f32.mxu0 0.0
  %335 = vmatmul.mubr.f32.gmra.mrb[0].mxu0 %v268
  %v336 = vpop.f32.mrb[0].mxu0
  %v337 = vadd.f32 0.0, %v336
  %v338 = vpop.f32.mrb[0].mxu0
  %339 = vdwg.mxu0
  %v340 = vld [vmem:[%s6] sm:$0x1]
  %v341 = vld [vmem:[%s7] sm:$0x1]
  %v342 = vsel %vm266, %v337, 0.0
  %v343 = vrot.slane %v342, 4
  %v344 = vadd.f32 %v342, %v343
  %v345 = vrot.slane %v344, 2
  %v346 = vadd.f32 %v344, %v345
  %v347 = vrot.slane %v346, 1
  %v348 = vadd.f32 %v346, %v347
  %v349 = vrcp.pop 8.0
  %v350 = vmul.f32 %v348, %v349
  %v351 = vsub.f32 %v337, %v350
  %v352 = vmul.f32 %v351, %v351
  %v353 = vsel %vm266, %v352, 0.0
  %v354 = vrot.slane %v353, 4
  %v355 = vadd.f32 %v353, %v354
  %v356 = vrot.slane %v355, 2
  %v357 = vadd.f32 %v355, %v356
  %v358 = vrot.slane %v357, 1
  %v359 = vadd.f32 %v357, %v358
  %v360 = vmul.f32 %v359, %v349
  %v361 = vadd.f32 %v360, 1e-05
  %v362 = vrsqrt.pop %v361
  %v363 = vmul.f32 %v340, %v362
  %v365 = vlaneseq
  %v366 = vshrl.u32 %v365, 7
  %v367 = vsub.s32 0, %v366
  %v368 = vrot.slane %v363, %v367
  %v370 = vmul.f32 %v351, %v368
  %v372 = vlaneseq
  %v373 = vshrl.u32 %v372, 7
  %v374 = vsub.s32 0, %v373
  %v375 = vrot.slane %v341, %v374
  %v377 = vadd.f32 %v370, %v375
  %v378 = vmax.f32 %v377, 0.0
  %v379 = vld [vmem:[%s8] sm:$0xff]
  %v380 = vld [vmem:[%s8 + $0x8] sm:$0xff]
  %v381 = vld [vmem:[%s8 + $0x10] sm:$0xff]
  %v382 = vld [vmem:[%s8 + $0x18] sm:$0xff]
  %v383 = vld [vmem:[%s8 + $0x20] sm:$0xff]
  %v384 = vld [vmem:[%s8 + $0x28] sm:$0xff]
  %v385 = vld [vmem:[%s8 + $0x30] sm:$0xff]
  %v386 = vld [vmem:[%s8 + $0x38] sm:$0xff]
  %v388 = vsel %vm266, %v378, 0
  %390 = vmatprep.subr.mxu0 0.0
  %391 = vmatpush1.msra.mxu0 %v379
  %392 = vmatprep.subr.mxu0 0.0
  %393 = vmatpush1.msra.mxu0 %v380
  %394 = vmatprep.subr.mxu0 0.0
  %395 = vmatpush1.msra.mxu0 %v381
  %396 = vmatprep.subr.mxu0 0.0
  %397 = vmatpush1.msra.mxu0 %v382
  %398 = vmatprep.subr.mxu0 0.0
  %399 = vmatpush1.msra.mxu0 %v383
  %400 = vmatprep.subr.mxu0 0.0
  %401 = vmatpush1.msra.mxu0 %v384
  %402 = vmatprep.subr.mxu0 0.0
  %403 = vmatpush1.msra.mxu0 %v385
  %404 = vmatprep.subr.mxu0 0.0
  %405 = vmatpush1.msra.mxu0 %v386
  %406 = vmatprep.subr.mxu0 0.0
  %407 = vmatpush1.msra.mxu0 0.0
  %408 = vmatprep.subr.mxu0 0.0
  %409 = vmatpush1.msra.mxu0 0.0
  %410 = vmatprep.subr.mxu0 0.0
  %411 = vmatpush1.msra.mxu0 0.0
  %412 = vmatprep.subr.mxu0 0.0
  %413 = vmatpush1.msra.mxu0 0.0
  %414 = vmatprep.subr.mxu0 0.0
  %415 = vmatpush1.msra.mxu0 0.0
  %416 = vmatprep.subr.mxu0 0.0
  %417 = vmatpush1.msra.mxu0 0.0
  %418 = vmatprep.subr.mxu0 0.0
  %419 = vmatpush1.msra.mxu0 0.0
  %420 = vmatprep.subr.mxu0 0.0
  %421 = vmatpush1.msra.mxu0 0.0
  %422 = vmatprep.subr.mxu0 0.0
  %423 = vmatpush1.msra.mxu0 0.0
  %424 = vmatprep.subr.mxu0 0.0
  %425 = vmatpush1.msra.mxu0 0.0
  %426 = vmatprep.subr.mxu0 0.0
  %427 = vmatpush1.msra.mxu0 0.0
  %428 = vmatprep.subr.mxu0 0.0
  %429 = vmatpush1.msra.mxu0 0.0
  %430 = vmatprep.subr.mxu0 0.0
  %431 = vmatpush1.msra.mxu0 0.0
  %432 = vmatprep.subr.mxu0 0.0
  %433 = vmatpush1.msra.mxu0 0.0
  %434 = vmatprep.subr.mxu0 0.0
  %435 = vmatpush1.msra.mxu0 0.0
  %436 = vmatprep.subr.mxu0 0.0
  %437 = vmatpush1.msra.mxu0 0.0
  %438 = vmatprep.subr.mxu0 0.0
  %439 = vmatpush1.msra.mxu0 0.0
  %440 = vmatprep.subr.mxu0 0.0
  %441 = vmatpush1.msra.mxu0 0.0
  %442 = vmatprep.subr.mxu0 0.0
  %443 = vmatpush1.msra.mxu0 0.0
  %444 = vmatprep.subr.mxu0 0.0
  %445 = vmatpush1.msra.mxu0 0.0
  %446 = vmatprep.subr.mxu0 0.0
  %447 = vmatpush1.msra.mxu0 0.0
  %448 = vmatprep.subr.mxu0 0.0
  %449 = vmatpush1.msra.mxu0 0.0
  %450 = vmatprep.subr.mxu0 0.0
  %451 = vmatpush1.msra.mxu0 0.0
  %452 = vmatprep.subr.mxu0 0.0
  %453 = vmatpush1.msra.mxu0 0.0
  %454 = vmatprep.mubr.f32.mxu0 0.0
  %455 = vmatmul.mubr.f32.gmra.mrb[0].mxu0 %v388
  %v456 = vpop.f32.mrb[0].mxu0
  %v457 = vadd.f32 0.0, %v456
  %v458 = vpop.f32.mrb[0].mxu0
  %459 = vdwg.mxu0
  %v460 = vld [vmem:[%s9] sm:$0x1]
  %v461 = vld [vmem:[%s10] sm:$0x1]
  %vm462 = vcmask 261120
  %v463 = vsel %vm462, %v457, 0.0
  %v464 = vrot.slane %v463, 4
  %v465 = vadd.f32 %v463, %v464
  %v466 = vrot.slane %v465, 2
  %v467 = vadd.f32 %v465, %v466
  %v468 = vrot.slane %v467, 1
  %v469 = vadd.f32 %v467, %v468
  %v470 = vmul.f32 %v469, %v349
  %v471 = vsub.f32 %v457, %v470
  %v472 = vmul.f32 %v471, %v471
  %v473 = vsel %vm462, %v472, 0.0
  %v474 = vrot.slane %v473, 4
  %v475 = vadd.f32 %v473, %v474
  %v476 = vrot.slane %v475, 2
  %v477 = vadd.f32 %v475, %v476
  %v478 = vrot.slane %v477, 1
  %v479 = vadd.f32 %v477, %v478
  %v480 = vmul.f32 %v479, %v349
  %v481 = vadd.f32 %v480, 1e-05
  %v482 = vrsqrt.pop %v481
  %v483 = vmul.f32 %v460, %v482
  %v485 = vlaneseq
  %v486 = vshrl.u32 %v485, 7
  %v487 = vsub.s32 0, %v486
  %v488 = vrot.slane %v483, %v487
  %v490 = vmul.f32 %v471, %v488
  %v492 = vlaneseq
  %v493 = vshrl.u32 %v492, 7
  %v494 = vsub.s32 0, %v493
  %v495 = vrot.slane %v461, %v494
  %v497 = vadd.f32 %v490, %v495
  %v498 = vmax.f32 %v497, 0.0
  %499 = vset.pattern.permute.xlu0 0
  %500 = vperm.xlu0 %499, %v49
  %v501 = vpop.permute.xlu0 %500
  %vm502 = vcmp.eq.s32.totalorder %v51, %v501
  %vm503 = vcmp.eq.s32.totalorder %v52, %v501
  %v504 = vsel %vm502, 1.0, 0.0
  %v505 = vsel %vm503, 1.0, 0.0
  %v506 = vld [vmem:[%s2] sm:$0xff]
  %v507 = vld [vmem:[%s2 + $0x8] sm:$0xff]
  %v508 = vld [vmem:[%s2 + $0x10] sm:$0xff]
  %v509 = vld [vmem:[%s2 + $0x18] sm:$0xff]
  %v510 = vld [vmem:[%s2 + $0x20] sm:$0xff]
  %v511 = vld [vmem:[%s2 + $0x28] sm:$0xff]
  %v512 = vld [vmem:[%s2 + $0x30] sm:$0xff]
  %v513 = vld [vmem:[%s2 + $0x38] sm:$0xff]
  %v514 = vld [vmem:[%s2 + $0x40] sm:$0xff]
  %v515 = vld [vmem:[%s2 + $0x48] sm:$0xff]
  %v516 = vld [vmem:[%s2 + $0x50] sm:$0xff]
  %v517 = vld [vmem:[%s2 + $0x58] sm:$0xff]
  %v518 = vld [vmem:[%s2 + $0x60] sm:$0xff]
  %vm519 = vcmask 850944
  %v521 = vsel %vm519, %v60, 0
  %523 = vmatprep.subr.mxu0 0.0
  %524 = vmatpush1.msra.mxu0 %v506
  %525 = vmatprep.subr.mxu0 0.0
  %526 = vmatpush1.msra.mxu0 %v507
  %527 = vmatprep.subr.mxu0 0.0
  %528 = vmatpush1.msra.mxu0 %v508
  %529 = vmatprep.subr.mxu0 0.0
  %530 = vmatpush1.msra.mxu0 %v509
  %531 = vmatprep.subr.mxu0 0.0
  %532 = vmatpush1.msra.mxu0 %v510
  %533 = vmatprep.subr.mxu0 0.0
  %534 = vmatpush1.msra.mxu0 %v511
  %535 = vmatprep.subr.mxu0 0.0
  %536 = vmatpush1.msra.mxu0 %v512
  %537 = vmatprep.subr.mxu0 0.0
  %538 = vmatpush1.msra.mxu0 %v513
  %539 = vmatprep.subr.mxu0 0.0
  %540 = vmatpush1.msra.mxu0 %v514
  %541 = vmatprep.subr.mxu0 0.0
  %542 = vmatpush1.msra.mxu0 %v515
  %543 = vmatprep.subr.mxu0 0.0
  %544 = vmatpush1.msra.mxu0 %v516
  %545 = vmatprep.subr.mxu0 0.0
  %546 = vmatpush1.msra.mxu0 %v517
  %547 = vmatprep.subr.mxu0 0.0
  %548 = vmatpush1.msra.mxu0 %v518
  %549 = vmatprep.subr.mxu0 0.0
  %550 = vmatpush1.msra.mxu0 0.0
  %551 = vmatprep.subr.mxu0 0.0
  %552 = vmatpush1.msra.mxu0 0.0
  %553 = vmatprep.subr.mxu0 0.0
  %554 = vmatpush1.msra.mxu0 0.0
  %555 = vmatprep.subr.mxu0 0.0
  %556 = vmatpush1.msra.mxu0 0.0
  %557 = vmatprep.subr.mxu0 0.0
  %558 = vmatpush1.msra.mxu0 0.0
  %559 = vmatprep.subr.mxu0 0.0
  %560 = vmatpush1.msra.mxu0 0.0
  %561 = vmatprep.subr.mxu0 0.0
  %562 = vmatpush1.msra.mxu0 0.0
  %563 = vmatprep.subr.mxu0 0.0
  %564 = vmatpush1.msra.mxu0 0.0
  %565 = vmatprep.subr.mxu0 0.0
  %566 = vmatpush1.msra.mxu0 0.0
  %567 = vmatprep.subr.mxu0 0.0
  %568 = vmatpush1.msra.mxu0 0.0
  %569 = vmatprep.subr.mxu0 0.0
  %570 = vmatpush1.msra.mxu0 0.0
  %571 = vmatprep.subr.mxu0 0.0
  %572 = vmatpush1.msra.mxu0 0.0
  %573 = vmatprep.subr.mxu0 0.0
  %574 = vmatpush1.msra.mxu0 0.0
  %575 = vmatprep.subr.mxu0 0.0
  %576 = vmatpush1.msra.mxu0 0.0
  %577 = vmatprep.subr.mxu0 0.0
  %578 = vmatpush1.msra.mxu0 0.0
  %579 = vmatprep.subr.mxu0 0.0
  %580 = vmatpush1.msra.mxu0 0.0
  %581 = vmatprep.subr.mxu0 0.0
  %582 = vmatpush1.msra.mxu0 0.0
  %583 = vmatprep.subr.mxu0 0.0
  %584 = vmatpush1.msra.mxu0 0.0
  %585 = vmatprep.subr.mxu0 0.0
  %586 = vmatpush1.msra.mxu0 0.0
  %587 = vmatprep.mubr.f32.mxu0 0.0
  %588 = vmatmul.mubr.f32.gmra.mrb[0].mxu0 %v521
  %v589 = vpop.f32.mrb[0].mxu0
  %v590 = vadd.f32 0.0, %v589
  %v591 = vpop.f32.mrb[0].mxu0
  %592 = vdwg.mxu0
  %v593 = vld [vmem:[%s3] sm:$0xff]
  %v594 = vld [vmem:[%s3 + $0x8] sm:$0xff]
  %v595 = vld [vmem:[%s3 + $0x10] sm:$0xff]
  %v596 = vld [vmem:[%s3 + $0x18] sm:$0xff]
  %v597 = vld [vmem:[%s3 + $0x20] sm:$0xff]
  %v598 = vld [vmem:[%s3 + $0x28] sm:$0xff]
  %v599 = vld [vmem:[%s3 + $0x30] sm:$0xff]
  %v600 = vld [vmem:[%s3 + $0x38] sm:$0xff]
  %v601 = vld [vmem:[%s3 + $0x40] sm:$0xff]
  %v602 = vld [vmem:[%s3 + $0x48] sm:$0xff]
  %v603 = vld [vmem:[%s3 + $0x50] sm:$0xff]
  %v604 = vld [vmem:[%s3 + $0x58] sm:$0xff]
  %v605 = vld [vmem:[%s3 + $0x60] sm:$0xff]
  %v606 = vld [vmem:[%s3 + $0x68] sm:$0xff]
  %v607 = vld [vmem:[%s3 + $0x70] sm:$0xff]
  %v608 = vld [vmem:[%s3 + $0x78] sm:$0xff]
  %v609 = vld [vmem:[%s3 + $0x80] sm:$0xff]
  %v610 = vld [vmem:[%s3 + $0x88] sm:$0xff]
  %v611 = vld [vmem:[%s3 + $0x90] sm:$0xff]
  %v612 = vld [vmem:[%s3 + $0x98] sm:$0xff]
  %v613 = vld [vmem:[%s3 + $0xa0] sm:$0xff]
  %v614 = vld [vmem:[%s3 + $0xa8] sm:$0xff]
  %v615 = vld [vmem:[%s3 + $0xb0] sm:$0xff]
  %v616 = vld [vmem:[%s3 + $0xb8] sm:$0xff]
  %v617 = vld [vmem:[%s3 + $0xc0] sm:$0xff]
  %vm618 = vcmask 588800
  %v620 = vsel %vm618, %v505, 0
  %622 = vmatprep.subr.mxu0 0.0
  %623 = vmatpush1.msra.mxu0 %v593
  %624 = vmatprep.subr.mxu0 0.0
  %625 = vmatpush1.msra.mxu0 %v594
  %626 = vmatprep.subr.mxu0 0.0
  %627 = vmatpush1.msra.mxu0 %v595
  %628 = vmatprep.subr.mxu0 0.0
  %629 = vmatpush1.msra.mxu0 %v596
  %630 = vmatprep.subr.mxu0 0.0
  %631 = vmatpush1.msra.mxu0 %v597
  %632 = vmatprep.subr.mxu0 0.0
  %633 = vmatpush1.msra.mxu0 %v598
  %634 = vmatprep.subr.mxu0 0.0
  %635 = vmatpush1.msra.mxu0 %v599
  %636 = vmatprep.subr.mxu0 0.0
  %637 = vmatpush1.msra.mxu0 %v600
  %638 = vmatprep.subr.mxu0 0.0
  %639 = vmatpush1.msra.mxu0 %v601
  %640 = vmatprep.subr.mxu0 0.0
  %641 = vmatpush1.msra.mxu0 %v602
  %642 = vmatprep.subr.mxu0 0.0
  %643 = vmatpush1.msra.mxu0 %v603
  %644 = vmatprep.subr.mxu0 0.0
  %645 = vmatpush1.msra.mxu0 %v604
  %646 = vmatprep.subr.mxu0 0.0
  %647 = vmatpush1.msra.mxu0 %v605
  %648 = vmatprep.subr.mxu0 0.0
  %649 = vmatpush1.msra.mxu0 %v606
  %650 = vmatprep.subr.mxu0 0.0
  %651 = vmatpush1.msra.mxu0 %v607
  %652 = vmatprep.subr.mxu0 0.0
  %653 = vmatpush1.msra.mxu0 %v608
  %654 = vmatprep.subr.mxu0 0.0
  %655 = vmatpush1.msra.mxu0 %v609
  %656 = vmatprep.subr.mxu0 0.0
  %657 = vmatpush1.msra.mxu0 %v610
  %658 = vmatprep.subr.mxu0 0.0
  %659 = vmatpush1.msra.mxu0 %v611
  %660 = vmatprep.subr.mxu0 0.0
  %661 = vmatpush1.msra.mxu0 %v612
  %662 = vmatprep.subr.mxu0 0.0
  %663 = vmatpush1.msra.mxu0 %v613
  %664 = vmatprep.subr.mxu0 0.0
  %665 = vmatpush1.msra.mxu0 %v614
  %666 = vmatprep.subr.mxu0 0.0
  %667 = vmatpush1.msra.mxu0 %v615
  %668 = vmatprep.subr.mxu0 0.0
  %669 = vmatpush1.msra.mxu0 %v616
  %670 = vmatprep.subr.mxu0 0.0
  %671 = vmatpush1.msra.mxu0 %v617
  %672 = vmatprep.subr.mxu0 0.0
  %673 = vmatpush1.msra.mxu0 0.0
  %674 = vmatprep.subr.mxu0 0.0
  %675 = vmatpush1.msra.mxu0 0.0
  %676 = vmatprep.subr.mxu0 0.0
  %677 = vmatpush1.msra.mxu0 0.0
  %678 = vmatprep.subr.mxu0 0.0
  %679 = vmatpush1.msra.mxu0 0.0
  %680 = vmatprep.subr.mxu0 0.0
  %681 = vmatpush1.msra.mxu0 0.0
  %682 = vmatprep.subr.mxu0 0.0
  %683 = vmatpush1.msra.mxu0 0.0
  %684 = vmatprep.subr.mxu0 0.0
  %685 = vmatpush1.msra.mxu0 0.0
  %686 = vmatprep.mubr.f32.mxu0 %v620
  %687 = vmatmul.mubr.f32.gmra.mrb[0].mxu0 %v504
  %v688 = vpop.f32.mrb[0].mxu0
  %v689 = vadd.f32 0.0, %v688
  %v690 = vpop.f32.mrb[0].mxu0
  %691 = vdwg.mxu0
  %v692 = vmul.f32 %v590, %v689
  %v693 = vld [vmem:[%s11] sm:$0x1]
  %v695 = vlaneseq
  %v696 = vshrl.u32 %v695, 7
  %v697 = vsub.s32 0, %v696
  %v698 = vrot.slane %v693, %v697
  %v700 = vmul.f32 %v692, %v698
  %v701 = vsel %vm462, %v700, 0.0
  %702 = vadd.xlane.f32.xlu0 %v701
  %v703 = vpop.xlane.xlu0 %702
  %v704 = vld [vmem:[%s12] sm:$0x1]
  %v706 = vlaneseq
  %v707 = vshrl.u32 %v706, 7
  %v708 = vsub.s32 0, %v707
  %v709 = vrot.slane %v704, %v708
  %v711 = vmul.f32 %v498, %v709
  %v712 = vsel %vm462, %v711, 0.0
  %713 = vadd.xlane.f32.xlu0 %v712
  %v714 = vpop.xlane.xlu0 %713
  %v715 = vadd.f32 %v703, %v714
  %s716 = sld [smem:[#allocation2]]
  %v717 = vstv %s716
  %v718 = vadd.f32 %v715, %v717
  %v719 = vxor.u32 %v718, 2147483648
  %v720 = vmul.f32 %v719, 1.442695
  %v721 = vpow.pop %v720
  %v722 = vadd.f32 %v721, 1.0
  %v723 = vrcp.pop %v722
  %v724 = vmul.f32 1.0, %v723
  %vm725 = vcmask 7168
  %726 = vst.msk [vmem:[%s14] sm:$0xff] %vm725, %v724
  // Predicated region
  $region58: #{tpu_custom_call.1} parent=0 // pred_check
    _
  $region59: #{tpu_custom_call.1} parent=0 // pred_check_branch
    %728 = sbr.rel (0) target = $region61
  $region60: #{tpu_custom_call.1} parent=0 // pred_region
    _
  $region61: #{tpu_custom_call.1} parent=0 // pred_fallthru
    _
  // Predicated region
  $region62: #{tpu_custom_call.1} parent=0 // pred_check
    _
  $region63: #{tpu_custom_call.1} parent=0 // pred_check_branch
    %730 = sbr.rel (0) target = $region65
  $region64: #{tpu_custom_call.1} parent=0 // pred_region
    _
  $region65: #{tpu_custom_call.1} parent=0 // pred_fallthru
    _

</llo_original>
